<compile_context>
chip_gen: v5e
topology: v5e:2x2
jax: 0.10.0
libtpu: 0.0.40
codegen_flags: <defaults>
</compile_context>

<pallas_src>
import functools
import math

import jax
import jax.numpy as jnp
from jax.experimental import pallas as pl
from jax.experimental.pallas import tpu as pltpu


def _round_up(n, m):
    return ((n + m - 1) // m) * m


def _conv_module_kernel(x_ref, ln_g_ref, ln_b_ref,
                        w_up_a_ref, b_up_a_ref, w_up_b_ref, b_up_b_ref,
                        w_dw_ref, bn_scale_ref, bn_shift_ref,
                        w_dn_ref, b_dn_ref, o_ref,
                        *, seq_len, seq_tile, pad_left, kernel_size):
    j = pl.program_id(1)
    tile_w = seq_tile + kernel_size - 1          # rows incl. conv halo

    # ---- LayerNorm over hidden (f32 math, eps = 1e-5) -----------------------
    x = x_ref[0, 0].astype(jnp.float32)          # (tile_w, H)
    mean = jnp.mean(x, axis=-1, keepdims=True)
    var = jnp.mean(jnp.square(x - mean), axis=-1, keepdims=True)
    xn = (x - mean) * jax.lax.rsqrt(var + 1e-5)
    xn = xn * ln_g_ref[...].astype(jnp.float32) + ln_b_ref[...].astype(jnp.float32)

    # ---- 1x1 up-conv + GLU (MXU matmuls in stored weight dtype, f32 acc) ----
    xn_c = xn.astype(w_up_a_ref.dtype)
    val = jnp.dot(xn_c, w_up_a_ref[...], preferred_element_type=jnp.float32)
    val = val + b_up_a_ref[...].astype(jnp.float32)
    gate = jnp.dot(xn_c, w_up_b_ref[...], preferred_element_type=jnp.float32)
    gate = gate + b_up_b_ref[...].astype(jnp.float32)
    glu = val * jax.nn.sigmoid(gate)             # (tile_w, inner) f32

    # Zero halo rows outside the real sequence (matches F.pad zeros on the
    # GLU output) so boundary conv taps contribute nothing.
    row = jax.lax.broadcasted_iota(jnp.int32, (tile_w, 1), 0)
    gidx = j * seq_tile - pad_left + row         # global (unpadded) time index
    glu = jnp.where((gidx >= 0) & (gidx < seq_len), glu, 0.0)

    # ---- depthwise conv along time: out[u] = sum_k w[k] * glu[u + k] --------
    w_dw = w_dw_ref[...].astype(jnp.float32)     # (K, inner)
    conv = jnp.zeros((seq_tile, glu.shape[1]), jnp.float32)
    for k in range(kernel_size):                 # static, unrolled taps
        conv = conv + w_dw[k:k + 1, :] * glu[k:k + seq_tile, :]

    # ---- BatchNorm (inference running stats, pre-folded) + SiLU -------------
    y = conv * bn_scale_ref[...].astype(jnp.float32) + bn_shift_ref[...].astype(jnp.float32)
    y = y * jax.nn.sigmoid(y)

    # ---- 1x1 down-conv -------------------------------------------------------
    out = jnp.dot(y.astype(w_dn_ref.dtype), w_dn_ref[...],
                  preferred_element_type=jnp.float32)
    out = out + b_dn_ref[...].astype(jnp.float32)
    # TODO(synk): dropout omitted (identity in eval mode; training would need
    # pltpu.prng_seed / pltpu.prng_random_bits masking).
    o_ref[0] = out.astype(o_ref.dtype)


def conformer_conv_module(hidden_states, params, *, kernel_size, seq_tile=256):
    """hidden_states: (batch, seq, hidden) -> (batch, seq, hidden)."""
    (ln_g, ln_b, w_up, b_up, w_dw, bn_scale, bn_shift, w_dn, b_dn) = params
    B, S, H = hidden_states.shape
    K = int(kernel_size)
    inner = w_dw.shape[1]
    assert w_up.shape == (H, 2 * inner)
    pad_l = K // 2
    pad_r = pad_l - ((K + 1) % 2)

    # Split the fused up-projection so GLU needs no in-kernel lane split.
    w_up_a, w_up_b = w_up[:, :inner], w_up[:, inner:]
    b_up_a, b_up_b = b_up[:, :inner], b_up[:, inner:]

    # Sequence tiling (rows on sublane axis, multiple of 8).
    tS = _round_up(min(int(seq_tile), _round_up(S, 8)), 8)
    S_pad = _round_up(S, tS)
    nT = S_pad // tS
    tW = tS + K - 1

    # Overlapped (haloed) time windows so the depthwise conv never crosses a
    # tile boundary.  Pad values are irrelevant: the kernel re-zeroes them.
    x_pad = jnp.pad(hidden_states, ((0, 0), (pad_l, (S_pad - S) + pad_r), (0, 0)))
    x_halo = jnp.stack([x_pad[:, j * tS:j * tS + tW, :] for j in range(nT)], axis=1)

    # VMEM budget: weights + in/out tiles (double-buffered) + f32 intermediates.
    weights = (ln_g, ln_b, w_up_a, b_up_a, w_up_b, b_up_b,
               w_dw, bn_scale, bn_shift, w_dn, b_dn)
    w_bytes = sum(int(math.prod(w.shape)) * w.dtype.itemsize for w in weights)
    io_bytes = tW * H * x_halo.dtype.itemsize + tS * H * hidden_states.dtype.itemsize
    interm_bytes = 4 * (tW * (H + 3 * inner) + tS * (2 * inner + H))
    est = 2 * (w_bytes + io_bytes) + interm_bytes
    vmem_limit = int(min(max(2 * est, 32 * 1024 * 1024), 60 * 1024 * 1024))

    kernel = functools.partial(_conv_module_kernel, seq_len=S, seq_tile=tS,
                               pad_left=pad_l, kernel_size=K)

    out = pl.pallas_call(
        kernel,
        out_shape=jax.ShapeDtypeStruct((B, S_pad, H), hidden_states.dtype),
        grid_spec=pltpu.PrefetchScalarGridSpec(
            num_scalar_prefetch=0,
            grid=(B, nT),
            in_specs=[
                pl.BlockSpec((1, 1, tW, H), lambda b, j: (b, j, 0, 0)),   # haloed x
                pl.BlockSpec((1, H), lambda b, j: (0, 0)),                # ln gamma
                pl.BlockSpec((1, H), lambda b, j: (0, 0)),                # ln beta
                pl.BlockSpec((H, inner), lambda b, j: (0, 0)),            # up W (value)
                pl.BlockSpec((1, inner), lambda b, j: (0, 0)),            # up b (value)
                pl.BlockSpec((H, inner), lambda b, j: (0, 0)),            # up W (gate)
                pl.BlockSpec((1, inner), lambda b, j: (0, 0)),            # up b (gate)
                pl.BlockSpec((K, inner), lambda b, j: (0, 0)),            # depthwise taps
                pl.BlockSpec((1, inner), lambda b, j: (0, 0)),            # bn scale
                pl.BlockSpec((1, inner), lambda b, j: (0, 0)),            # bn shift
                pl.BlockSpec((inner, H), lambda b, j: (0, 0)),            # down W
                pl.BlockSpec((1, H), lambda b, j: (0, 0)),                # down b
            ],
            out_specs=pl.BlockSpec((1, tS, H), lambda b, j: (b, j, 0)),
        ),
        compiler_params=pltpu.CompilerParams(
            dimension_semantics=("parallel", "parallel"),
            vmem_limit_bytes=vmem_limit),
    )(x_halo, ln_g, ln_b, w_up_a, b_up_a, w_up_b, b_up_b,
      w_dw, bn_scale, bn_shift, w_dn, b_dn)
    return out[:, :S, :]


def init_params(key, hidden_dim, conv_expansion_factor, conv_kernel_size,
                dtype=jnp.float32):
    inner = hidden_dim * conv_expansion_factor
    ks = jax.random.split(key, 9)
    ln_g = jnp.ones((1, hidden_dim), dtype)
    ln_b = jnp.zeros((1, hidden_dim), dtype)
    # 1x1 convs stored as (in, out) matmul weights (transpose of PyTorch Conv1d).
    w_up = jax.random.normal(ks[0], (hidden_dim, 2 * inner), dtype) * (hidden_dim ** -0.5)
    b_up = jax.random.normal(ks[1], (1, 2 * inner), dtype) * 0.01
    # Depthwise taps stored as (K, inner) (transpose of PyTorch (inner, 1, K)).
    w_dw = jax.random.normal(ks[2], (conv_kernel_size, inner), dtype) * (conv_kernel_size ** -0.5)
    # BatchNorm1d inference parameters, folded into per-channel scale/shift.
    bn_gamma = 1.0 + 0.1 * jax.random.normal(ks[3], (1, inner), dtype)
    bn_beta = 0.1 * jax.random.normal(ks[4], (1, inner), dtype)
    bn_rmean = 0.1 * jax.random.normal(ks[5], (1, inner), dtype)
    bn_rvar = 1.0 + 0.1 * jnp.abs(jax.random.normal(ks[6], (1, inner), dtype))
    bn_scale = (bn_gamma * jax.lax.rsqrt(bn_rvar + 1e-5)).astype(dtype)
    bn_shift = (bn_beta - bn_rmean * bn_scale).astype(dtype)
    w_dn = jax.random.normal(ks[7], (inner, hidden_dim), dtype) * (inner ** -0.5)
    b_dn = jax.random.normal(ks[8], (1, hidden_dim), dtype) * 0.01
    return (ln_g, ln_b, w_up, b_up, w_dw, bn_scale, bn_shift, w_dn, b_dn)


def _reference(x, params, *, kernel_size):
    (ln_g, ln_b, w_up, b_up, w_dw, bn_scale, bn_shift, w_dn, b_dn) = params
    K = int(kernel_size)
    pad_l = K // 2
    pad_r = pad_l - ((K + 1) % 2)
    B, S, H = x.shape
    inner = w_dw.shape[1]

    xf = x.astype(jnp.float32)
    mean = jnp.mean(xf, axis=-1, keepdims=True)
    var = jnp.mean(jnp.square(xf - mean), axis=-1, keepdims=True)
    xn = (xf - mean) * jax.lax.rsqrt(var + 1e-5) * ln_g[0] + ln_b[0]

    h = xn @ w_up.astype(jnp.float32) + b_up[0]
    glu = h[..., :inner] * jax.nn.sigmoid(h[..., inner:])

    gp = jnp.pad(glu, ((0, 0), (pad_l, pad_r), (0, 0)))
    conv = sum(w_dw[k].astype(jnp.float32) * gp[:, k:k + S, :] for k in range(K))

    y = conv * bn_scale[0] + bn_shift[0]
    y = y * jax.nn.sigmoid(y)
    out = y @ w_dn.astype(jnp.float32) + b_dn[0]
    return out.astype(x.dtype)


if __name__ == "__main__":
    batch, seq, hidden = 2, 24, 32
    conv_expansion_factor, conv_kernel_size = 2, 15

    key = jax.random.PRNGKey(0)
    k_x, k_p = jax.random.split(key)
    hidden_states = jax.random.normal(k_x, (batch, seq, hidden), jnp.float32)
    params = init_params(k_p, hidden, conv_expansion_factor, conv_kernel_size)

    # seq_tile=8 exercises multi-tile halos + boundary masking at small shapes.
    out = conformer_conv_module(hidden_states, params,
                                kernel_size=conv_kernel_size, seq_tile=8)
    out = jax.block_until_ready(out)

    ref = _reference(hidden_states, params, kernel_size=conv_kernel_size)
    assert out.shape == (batch, seq, hidden)
    max_err = float(jnp.max(jnp.abs(out - ref)))
    assert jnp.allclose(out, ref, atol=2e-3, rtol=2e-3), f"max abs err {max_err}"

    print("KERNEL_OK")
</pallas_src>

<mosaic_0001>
module attributes {stable_mosaic.version = 11 : i64} {
  func.func @_conv_module_kernel(%arg0: i32, %arg1: i32, %arg2: memref<1x1x22x32xf32, #tpu.memory_space<vmem>>, %arg3: memref<1x32xf32, #tpu.memory_space<vmem>>, %arg4: memref<1x32xf32, #tpu.memory_space<vmem>>, %arg5: memref<32x64xf32, #tpu.memory_space<vmem>>, %arg6: memref<1x64xf32, #tpu.memory_space<vmem>>, %arg7: memref<32x64xf32, #tpu.memory_space<vmem>>, %arg8: memref<1x64xf32, #tpu.memory_space<vmem>>, %arg9: memref<15x64xf32, #tpu.memory_space<vmem>>, %arg10: memref<1x64xf32, #tpu.memory_space<vmem>>, %arg11: memref<1x64xf32, #tpu.memory_space<vmem>>, %arg12: memref<64x32xf32, #tpu.memory_space<vmem>>, %arg13: memref<1x32xf32, #tpu.memory_space<vmem>>, %arg14: memref<1x8x32xf32, #tpu.memory_space<vmem>>) attributes {dimension_semantics = [#tpu.dimension_semantics<parallel>, #tpu.dimension_semantics<parallel>], iteration_bounds = array<i64: 2, 3>, scalar_prefetch = 0 : i64, scratch_operands = 0 : i64, tpu.core_type = #tpu.core_type<tc>, window_params = [{transform_indices = @transform_0, window_bounds = array<i64: 1, 1, 22, 32>}, {pipeline_mode = #tpu.pipeline_mode<synchronous>, transform_indices = @transform_1, window_bounds = array<i64: 1, 32>}, {pipeline_mode = #tpu.pipeline_mode<synchronous>, transform_indices = @transform_2, window_bounds = array<i64: 1, 32>}, {pipeline_mode = #tpu.pipeline_mode<synchronous>, transform_indices = @transform_3, window_bounds = array<i64: 32, 64>}, {pipeline_mode = #tpu.pipeline_mode<synchronous>, transform_indices = @transform_4, window_bounds = array<i64: 1, 64>}, {pipeline_mode = #tpu.pipeline_mode<synchronous>, transform_indices = @transform_5, window_bounds = array<i64: 32, 64>}, {pipeline_mode = #tpu.pipeline_mode<synchronous>, transform_indices = @transform_6, window_bounds = array<i64: 1, 64>}, {pipeline_mode = #tpu.pipeline_mode<synchronous>, transform_indices = @transform_7, window_bounds = array<i64: 15, 64>}, {pipeline_mode = #tpu.pipeline_mode<synchronous>, transform_indices = @transform_8, window_bounds = array<i64: 1, 64>}, {pipeline_mode = #tpu.pipeline_mode<synchronous>, transform_indices = @transform_9, window_bounds = array<i64: 1, 64>}, {pipeline_mode = #tpu.pipeline_mode<synchronous>, transform_indices = @transform_10, window_bounds = array<i64: 64, 32>}, {pipeline_mode = #tpu.pipeline_mode<synchronous>, transform_indices = @transform_11, window_bounds = array<i64: 1, 32>}, {transform_indices = @transform_12, window_bounds = array<i64: 1, 8, 32>}]} {
    %c0 = arith.constant 0 : index
    %c0_0 = arith.constant 0 : index
    %c0_1 = arith.constant 0 : index
    %c0_2 = arith.constant 0 : index
    %0 = vector.load %arg2[%c0, %c0_0, %c0_1, %c0_2] : memref<1x1x22x32xf32, #tpu.memory_space<vmem>>, vector<1x1x22x32xf32>
    %1 = vector.shape_cast %0 : vector<1x1x22x32xf32> to vector<22x32xf32>
    %cst = arith.constant dense<0.000000e+00> : vector<22xf32>
    %2 = vector.multi_reduction <add>, %1, %cst [1] : vector<22x32xf32> to vector<22xf32>
    %3 = vector.shape_cast %2 : vector<22xf32> to vector<22x1xf32>
    %cst_3 = arith.constant 3.200000e+01 : f32
    %4 = vector.broadcast %cst_3 : f32 to vector<22x1xf32>
    %5 = arith.divf %3, %4 : vector<22x1xf32>
    %6 = vector.broadcast %5 : vector<22x1xf32> to vector<22x32xf32>
    %7 = arith.subf %1, %6 : vector<22x32xf32>
    %8 = arith.mulf %7, %7 : vector<22x32xf32>
    %cst_4 = arith.constant dense<0.000000e+00> : vector<22xf32>
    %9 = vector.multi_reduction <add>, %8, %cst_4 [1] : vector<22x32xf32> to vector<22xf32>
    %10 = vector.shape_cast %9 : vector<22xf32> to vector<22x1xf32>
    %cst_5 = arith.constant 3.200000e+01 : f32
    %11 = vector.broadcast %cst_5 : f32 to vector<22x1xf32>
    %12 = arith.divf %10, %11 : vector<22x1xf32>
    %13 = vector.broadcast %5 : vector<22x1xf32> to vector<22x32xf32>
    %14 = arith.subf %1, %13 : vector<22x32xf32>
    %cst_6 = arith.constant 9.99999974E-6 : f32
    %15 = vector.broadcast %cst_6 : f32 to vector<22x1xf32>
    %16 = arith.addf %12, %15 : vector<22x1xf32>
    %17 = math.rsqrt %16 : vector<22x1xf32>
    %18 = vector.broadcast %17 : vector<22x1xf32> to vector<22x32xf32>
    %19 = arith.mulf %14, %18 : vector<22x32xf32>
    %c0_7 = arith.constant 0 : index
    %c0_8 = arith.constant 0 : index
    %20 = vector.load %arg3[%c0_7, %c0_8] : memref<1x32xf32, #tpu.memory_space<vmem>>, vector<1x32xf32>
    %21 = vector.broadcast %20 : vector<1x32xf32> to vector<22x32xf32>
    %22 = arith.mulf %19, %21 : vector<22x32xf32>
    %c0_9 = arith.constant 0 : index
    %c0_10 = arith.constant 0 : index
    %23 = vector.load %arg4[%c0_9, %c0_10] : memref<1x32xf32, #tpu.memory_space<vmem>>, vector<1x32xf32>
    %24 = vector.broadcast %23 : vector<1x32xf32> to vector<22x32xf32>
    %25 = arith.addf %22, %24 : vector<22x32xf32>
    %c0_11 = arith.constant 0 : index
    %c0_12 = arith.constant 0 : index
    %26 = vector.load %arg5[%c0_11, %c0_12] : memref<32x64xf32, #tpu.memory_space<vmem>>, vector<32x64xf32>
    %cst_13 = arith.constant dense<0.000000e+00> : vector<22x64xf32>
    %27 = tpu.matmul %25, %26, %cst_13 {dimension_numbers = #tpu.dot_dimension_numbers<[1], [0], [0], [1], [0, 0, 1, 1], [], []>} : vector<22x32xf32>, vector<32x64xf32>, vector<22x64xf32> -> vector<22x64xf32>
    %c0_14 = arith.constant 0 : index
    %c0_15 = arith.constant 0 : index
    %28 = vector.load %arg6[%c0_14, %c0_15] : memref<1x64xf32, #tpu.memory_space<vmem>>, vector<1x64xf32>
    %29 = vector.broadcast %28 : vector<1x64xf32> to vector<22x64xf32>
    %30 = arith.addf %27, %29 : vector<22x64xf32>
    %c0_16 = arith.constant 0 : index
    %c0_17 = arith.constant 0 : index
    %31 = vector.load %arg7[%c0_16, %c0_17] : memref<32x64xf32, #tpu.memory_space<vmem>>, vector<32x64xf32>
    %cst_18 = arith.constant dense<0.000000e+00> : vector<22x64xf32>
    %32 = tpu.matmul %25, %31, %cst_18 {dimension_numbers = #tpu.dot_dimension_numbers<[1], [0], [0], [1], [0, 0, 1, 1], [], []>} : vector<22x32xf32>, vector<32x64xf32>, vector<22x64xf32> -> vector<22x64xf32>
    %c0_19 = arith.constant 0 : index
    %c0_20 = arith.constant 0 : index
    %33 = vector.load %arg8[%c0_19, %c0_20] : memref<1x64xf32, #tpu.memory_space<vmem>>, vector<1x64xf32>
    %34 = vector.broadcast %33 : vector<1x64xf32> to vector<22x64xf32>
    %35 = arith.addf %32, %34 : vector<22x64xf32>
    %36 = arith.negf %35 : vector<22x64xf32>
    %37 = math.exp %36 : vector<22x64xf32>
    %cst_21 = arith.constant 1.000000e+00 : f32
    %38 = vector.broadcast %cst_21 : f32 to vector<22x64xf32>
    %39 = arith.addf %38, %37 : vector<22x64xf32>
    %40 = arith.divf %38, %39 : vector<22x64xf32>
    %41 = arith.mulf %30, %40 : vector<22x64xf32>
    %42 = tpu.iota {dimensions = array<i32: 0>} : vector<22x1xi32>
    %c8_i32 = arith.constant 8 : i32
    %43 = arith.muli %arg1, %c8_i32 : i32
    %c7_i32 = arith.constant 7 : i32
    %44 = arith.subi %43, %c7_i32 : i32
    %45 = vector.broadcast %44 : i32 to vector<22x1xi32>
    %46 = arith.addi %45, %42 : vector<22x1xi32>
    %c0_i32 = arith.constant 0 : i32
    %47 = vector.broadcast %c0_i32 : i32 to vector<22x1xi32>
    %48 = arith.cmpi sge, %46, %47 : vector<22x1xi32>
    %c24_i32 = arith.constant 24 : i32
    %49 = vector.broadcast %c24_i32 : i32 to vector<22x1xi32>
    %50 = arith.cmpi slt, %46, %49 : vector<22x1xi32>
    %51 = arith.andi %48, %50 : vector<22x1xi1>
    %cst_22 = arith.constant 0.000000e+00 : f32
    %52 = vector.shape_cast %51 : vector<22x1xi1> to vector<22x1xi1>
    %53 = vector.broadcast %52 : vector<22x1xi1> to vector<22x64xi1>
    %54 = vector.broadcast %cst_22 : f32 to vector<22x64xf32>
    %55 = arith.select %53, %41, %54 : vector<22x64xi1>, vector<22x64xf32>
    %c0_23 = arith.constant 0 : index
    %c0_24 = arith.constant 0 : index
    %56 = vector.load %arg9[%c0_23, %c0_24] : memref<15x64xf32, #tpu.memory_space<vmem>>, vector<15x64xf32>
    %cst_25 = arith.constant 0.000000e+00 : f32
    %57 = vector.broadcast %cst_25 : f32 to vector<8x64xf32>
    %58 = vector.extract_strided_slice %56 {offsets = [0, 0], sizes = [1, 64], strides = [1, 1]} : vector<15x64xf32> to vector<1x64xf32>
    %59 = vector.extract_strided_slice %55 {offsets = [0, 0], sizes = [8, 64], strides = [1, 1]} : vector<22x64xf32> to vector<8x64xf32>
    %60 = vector.broadcast %58 : vector<1x64xf32> to vector<8x64xf32>
    %61 = arith.mulf %60, %59 : vector<8x64xf32>
    %62 = arith.addf %57, %61 : vector<8x64xf32>
    %63 = vector.extract_strided_slice %56 {offsets = [1, 0], sizes = [1, 64], strides = [1, 1]} : vector<15x64xf32> to vector<1x64xf32>
    %64 = vector.extract_strided_slice %55 {offsets = [1, 0], sizes = [8, 64], strides = [1, 1]} : vector<22x64xf32> to vector<8x64xf32>
    %65 = vector.broadcast %63 : vector<1x64xf32> to vector<8x64xf32>
    %66 = arith.mulf %65, %64 : vector<8x64xf32>
    %67 = arith.addf %62, %66 : vector<8x64xf32>
    %68 = vector.extract_strided_slice %56 {offsets = [2, 0], sizes = [1, 64], strides = [1, 1]} : vector<15x64xf32> to vector<1x64xf32>
    %69 = vector.extract_strided_slice %55 {offsets = [2, 0], sizes = [8, 64], strides = [1, 1]} : vector<22x64xf32> to vector<8x64xf32>
    %70 = vector.broadcast %68 : vector<1x64xf32> to vector<8x64xf32>
    %71 = arith.mulf %70, %69 : vector<8x64xf32>
    %72 = arith.addf %67, %71 : vector<8x64xf32>
    %73 = vector.extract_strided_slice %56 {offsets = [3, 0], sizes = [1, 64], strides = [1, 1]} : vector<15x64xf32> to vector<1x64xf32>
    %74 = vector.extract_strided_slice %55 {offsets = [3, 0], sizes = [8, 64], strides = [1, 1]} : vector<22x64xf32> to vector<8x64xf32>
    %75 = vector.broadcast %73 : vector<1x64xf32> to vector<8x64xf32>
    %76 = arith.mulf %75, %74 : vector<8x64xf32>
    %77 = arith.addf %72, %76 : vector<8x64xf32>
    %78 = vector.extract_strided_slice %56 {offsets = [4, 0], sizes = [1, 64], strides = [1, 1]} : vector<15x64xf32> to vector<1x64xf32>
    %79 = vector.extract_strided_slice %55 {offsets = [4, 0], sizes = [8, 64], strides = [1, 1]} : vector<22x64xf32> to vector<8x64xf32>
    %80 = vector.broadcast %78 : vector<1x64xf32> to vector<8x64xf32>
    %81 = arith.mulf %80, %79 : vector<8x64xf32>
    %82 = arith.addf %77, %81 : vector<8x64xf32>
    %83 = vector.extract_strided_slice %56 {offsets = [5, 0], sizes = [1, 64], strides = [1, 1]} : vector<15x64xf32> to vector<1x64xf32>
    %84 = vector.extract_strided_slice %55 {offsets = [5, 0], sizes = [8, 64], strides = [1, 1]} : vector<22x64xf32> to vector<8x64xf32>
    %85 = vector.broadcast %83 : vector<1x64xf32> to vector<8x64xf32>
    %86 = arith.mulf %85, %84 : vector<8x64xf32>
    %87 = arith.addf %82, %86 : vector<8x64xf32>
    %88 = vector.extract_strided_slice %56 {offsets = [6, 0], sizes = [1, 64], strides = [1, 1]} : vector<15x64xf32> to vector<1x64xf32>
    %89 = vector.extract_strided_slice %55 {offsets = [6, 0], sizes = [8, 64], strides = [1, 1]} : vector<22x64xf32> to vector<8x64xf32>
    %90 = vector.broadcast %88 : vector<1x64xf32> to vector<8x64xf32>
    %91 = arith.mulf %90, %89 : vector<8x64xf32>
    %92 = arith.addf %87, %91 : vector<8x64xf32>
    %93 = vector.extract_strided_slice %56 {offsets = [7, 0], sizes = [1, 64], strides = [1, 1]} : vector<15x64xf32> to vector<1x64xf32>
    %94 = vector.extract_strided_slice %55 {offsets = [7, 0], sizes = [8, 64], strides = [1, 1]} : vector<22x64xf32> to vector<8x64xf32>
    %95 = vector.broadcast %93 : vector<1x64xf32> to vector<8x64xf32>
    %96 = arith.mulf %95, %94 : vector<8x64xf32>
    %97 = arith.addf %92, %96 : vector<8x64xf32>
    %98 = vector.extract_strided_slice %56 {offsets = [8, 0], sizes = [1, 64], strides = [1, 1]} : vector<15x64xf32> to vector<1x64xf32>
    %99 = vector.extract_strided_slice %55 {offsets = [8, 0], sizes = [8, 64], strides = [1, 1]} : vector<22x64xf32> to vector<8x64xf32>
    %100 = vector.broadcast %98 : vector<1x64xf32> to vector<8x64xf32>
    %101 = arith.mulf %100, %99 : vector<8x64xf32>
    %102 = arith.addf %97, %101 : vector<8x64xf32>
    %103 = vector.extract_strided_slice %56 {offsets = [9, 0], sizes = [1, 64], strides = [1, 1]} : vector<15x64xf32> to vector<1x64xf32>
    %104 = vector.extract_strided_slice %55 {offsets = [9, 0], sizes = [8, 64], strides = [1, 1]} : vector<22x64xf32> to vector<8x64xf32>
    %105 = vector.broadcast %103 : vector<1x64xf32> to vector<8x64xf32>
    %106 = arith.mulf %105, %104 : vector<8x64xf32>
    %107 = arith.addf %102, %106 : vector<8x64xf32>
    %108 = vector.extract_strided_slice %56 {offsets = [10, 0], sizes = [1, 64], strides = [1, 1]} : vector<15x64xf32> to vector<1x64xf32>
    %109 = vector.extract_strided_slice %55 {offsets = [10, 0], sizes = [8, 64], strides = [1, 1]} : vector<22x64xf32> to vector<8x64xf32>
    %110 = vector.broadcast %108 : vector<1x64xf32> to vector<8x64xf32>
    %111 = arith.mulf %110, %109 : vector<8x64xf32>
    %112 = arith.addf %107, %111 : vector<8x64xf32>
    %113 = vector.extract_strided_slice %56 {offsets = [11, 0], sizes = [1, 64], strides = [1, 1]} : vector<15x64xf32> to vector<1x64xf32>
    %114 = vector.extract_strided_slice %55 {offsets = [11, 0], sizes = [8, 64], strides = [1, 1]} : vector<22x64xf32> to vector<8x64xf32>
    %115 = vector.broadcast %113 : vector<1x64xf32> to vector<8x64xf32>
    %116 = arith.mulf %115, %114 : vector<8x64xf32>
    %117 = arith.addf %112, %116 : vector<8x64xf32>
    %118 = vector.extract_strided_slice %56 {offsets = [12, 0], sizes = [1, 64], strides = [1, 1]} : vector<15x64xf32> to vector<1x64xf32>
    %119 = vector.extract_strided_slice %55 {offsets = [12, 0], sizes = [8, 64], strides = [1, 1]} : vector<22x64xf32> to vector<8x64xf32>
    %120 = vector.broadcast %118 : vector<1x64xf32> to vector<8x64xf32>
    %121 = arith.mulf %120, %119 : vector<8x64xf32>
    %122 = arith.addf %117, %121 : vector<8x64xf32>
    %123 = vector.extract_strided_slice %56 {offsets = [13, 0], sizes = [1, 64], strides = [1, 1]} : vector<15x64xf32> to vector<1x64xf32>
    %124 = vector.extract_strided_slice %55 {offsets = [13, 0], sizes = [8, 64], strides = [1, 1]} : vector<22x64xf32> to vector<8x64xf32>
    %125 = vector.broadcast %123 : vector<1x64xf32> to vector<8x64xf32>
    %126 = arith.mulf %125, %124 : vector<8x64xf32>
    %127 = arith.addf %122, %126 : vector<8x64xf32>
    %128 = vector.extract_strided_slice %56 {offsets = [14, 0], sizes = [1, 64], strides = [1, 1]} : vector<15x64xf32> to vector<1x64xf32>
    %129 = vector.extract_strided_slice %55 {offsets = [14, 0], sizes = [8, 64], strides = [1, 1]} : vector<22x64xf32> to vector<8x64xf32>
    %130 = vector.broadcast %128 : vector<1x64xf32> to vector<8x64xf32>
    %131 = arith.mulf %130, %129 : vector<8x64xf32>
    %132 = arith.addf %127, %131 : vector<8x64xf32>
    %c0_26 = arith.constant 0 : index
    %c0_27 = arith.constant 0 : index
    %133 = vector.load %arg10[%c0_26, %c0_27] : memref<1x64xf32, #tpu.memory_space<vmem>>, vector<1x64xf32>
    %134 = vector.broadcast %133 : vector<1x64xf32> to vector<8x64xf32>
    %135 = arith.mulf %132, %134 : vector<8x64xf32>
    %c0_28 = arith.constant 0 : index
    %c0_29 = arith.constant 0 : index
    %136 = vector.load %arg11[%c0_28, %c0_29] : memref<1x64xf32, #tpu.memory_space<vmem>>, vector<1x64xf32>
    %137 = vector.broadcast %136 : vector<1x64xf32> to vector<8x64xf32>
    %138 = arith.addf %135, %137 : vector<8x64xf32>
    %139 = arith.negf %138 : vector<8x64xf32>
    %140 = math.exp %139 : vector<8x64xf32>
    %cst_30 = arith.constant 1.000000e+00 : f32
    %141 = vector.broadcast %cst_30 : f32 to vector<8x64xf32>
    %142 = arith.addf %141, %140 : vector<8x64xf32>
    %143 = arith.divf %141, %142 : vector<8x64xf32>
    %144 = arith.mulf %138, %143 : vector<8x64xf32>
    %c0_31 = arith.constant 0 : index
    %c0_32 = arith.constant 0 : index
    %145 = vector.load %arg12[%c0_31, %c0_32] : memref<64x32xf32, #tpu.memory_space<vmem>>, vector<64x32xf32>
    %cst_33 = arith.constant dense<0.000000e+00> : vector<8x32xf32>
    %146 = tpu.matmul %144, %145, %cst_33 {dimension_numbers = #tpu.dot_dimension_numbers<[1], [0], [0], [1], [0, 0, 1, 1], [], []>} : vector<8x64xf32>, vector<64x32xf32>, vector<8x32xf32> -> vector<8x32xf32>
    %c0_34 = arith.constant 0 : index
    %c0_35 = arith.constant 0 : index
    %147 = vector.load %arg13[%c0_34, %c0_35] : memref<1x32xf32, #tpu.memory_space<vmem>>, vector<1x32xf32>
    %148 = vector.broadcast %147 : vector<1x32xf32> to vector<8x32xf32>
    %149 = arith.addf %146, %148 : vector<8x32xf32>
    %c0_36 = arith.constant 0 : index
    %c0_37 = arith.constant 0 : index
    %c0_38 = arith.constant 0 : index
    %150 = vector.load %arg14[%c0_36, %c0_37, %c0_38] : memref<1x8x32xf32, #tpu.memory_space<vmem>>, vector<1x8x32xf32>
    %151 = vector.shape_cast %150 : vector<1x8x32xf32> to vector<8x32xf32>
    %152 = vector.shape_cast %149 : vector<8x32xf32> to vector<1x8x32xf32>
    tpu.vector_store %arg14[%c0_36, %c0_37, %c0_38], %152 {strides = array<i32>} : memref<1x8x32xf32, #tpu.memory_space<vmem>>, vector<1x8x32xf32>,
    return
  }
  func.func @transform_0(%arg0: i32, %arg1: i32) -> (i32, i32, i32, i32) {
    %c0_i32 = arith.constant 0 : i32
    %c0_i32_0 = arith.constant 0 : i32
    %c0_i32_1 = arith.constant 0 : i32
    return %arg0, %arg1, %c0_i32, %c0_i32_0 : i32, i32, i32, i32
  }
  func.func @transform_1(%arg0: i32, %arg1: i32) -> (i32, i32) {
    %c0_i32 = arith.constant 0 : i32
    %c0_i32_0 = arith.constant 0 : i32
    %c0_i32_1 = arith.constant 0 : i32
    return %c0_i32, %c0_i32_0 : i32, i32
  }
  func.func @transform_2(%arg0: i32, %arg1: i32) -> (i32, i32) {
    %c0_i32 = arith.constant 0 : i32
    %c0_i32_0 = arith.constant 0 : i32
    %c0_i32_1 = arith.constant 0 : i32
    return %c0_i32, %c0_i32_0 : i32, i32
  }
  func.func @transform_3(%arg0: i32, %arg1: i32) -> (i32, i32) {
    %c0_i32 = arith.constant 0 : i32
    %c0_i32_0 = arith.constant 0 : i32
    %c0_i32_1 = arith.constant 0 : i32
    return %c0_i32, %c0_i32_0 : i32, i32
  }
  func.func @transform_4(%arg0: i32, %arg1: i32) -> (i32, i32) {
    %c0_i32 = arith.constant 0 : i32
    %c0_i32_0 = arith.constant 0 : i32
    %c0_i32_1 = arith.constant 0 : i32
    return %c0_i32, %c0_i32_0 : i32, i32
  }
  func.func @transform_5(%arg0: i32, %arg1: i32) -> (i32, i32) {
    %c0_i32 = arith.constant 0 : i32
    %c0_i32_0 = arith.constant 0 : i32
    %c0_i32_1 = arith.constant 0 : i32
    return %c0_i32, %c0_i32_0 : i32, i32
  }
  func.func @transform_6(%arg0: i32, %arg1: i32) -> (i32, i32) {
    %c0_i32 = arith.constant 0 : i32
    %c0_i32_0 = arith.constant 0 : i32
    %c0_i32_1 = arith.constant 0 : i32
    return %c0_i32, %c0_i32_0 : i32, i32
  }
  func.func @transform_7(%arg0: i32, %arg1: i32) -> (i32, i32) {
    %c0_i32 = arith.constant 0 : i32
    %c0_i32_0 = arith.constant 0 : i32
    %c0_i32_1 = arith.constant 0 : i32
    return %c0_i32, %c0_i32_0 : i32, i32
  }
  func.func @transform_8(%arg0: i32, %arg1: i32) -> (i32, i32) {
    %c0_i32 = arith.constant 0 : i32
    %c0_i32_0 = arith.constant 0 : i32
    %c0_i32_1 = arith.constant 0 : i32
    return %c0_i32, %c0_i32_0 : i32, i32
  }
  func.func @transform_9(%arg0: i32, %arg1: i32) -> (i32, i32) {
    %c0_i32 = arith.constant 0 : i32
    %c0_i32_0 = arith.constant 0 : i32
    %c0_i32_1 = arith.constant 0 : i32
    return %c0_i32, %c0_i32_0 : i32, i32
  }
  func.func @transform_10(%arg0: i32, %arg1: i32) -> (i32, i32) {
    %c0_i32 = arith.constant 0 : i32
    %c0_i32_0 = arith.constant 0 : i32
    %c0_i32_1 = arith.constant 0 : i32
    return %c0_i32, %c0_i32_0 : i32, i32
  }
  func.func @transform_11(%arg0: i32, %arg1: i32) -> (i32, i32) {
    %c0_i32 = arith.constant 0 : i32
    %c0_i32_0 = arith.constant 0 : i32
    %c0_i32_1 = arith.constant 0 : i32
    return %c0_i32, %c0_i32_0 : i32, i32
  }
  func.func @transform_12(%arg0: i32, %arg1: i32) -> (i32, i32, i32) {
    %c0_i32 = arith.constant 0 : i32
    %c0_i32_0 = arith.constant 0 : i32
    return %arg0, %arg1, %c0_i32 : i32, i32, i32
  }
}

</mosaic_0001>

<llo_original>
// kernel: tpu_custom_call.1
$region0: #{tpu_custom_call.1}
  #allocation0 [shape = 'u32[]', space=smem, size = 0x4, offset = 0x4, fixed_abs, tag = 'smem constant byte address 0x4 - core index']
  #allocation1 [shape = 'u32[72,128]{1,0:T(1,128)}', space=vmem, size = 0x9000, scoped, tag = 'internal scratch']
  %s0 = inlined_call_operand.vmem [shape: f32[2,3,22,32], index: 0, kind: input, shape index: {}]
  %s1 = inlined_call_operand.vmem [shape: f32[1,32], index: 1, kind: input, shape index: {}]
  %s2 = inlined_call_operand.vmem [shape: f32[1,32], index: 2, kind: input, shape index: {}]
  %s3 = inlined_call_operand.vmem [shape: f32[32,64], index: 3, kind: input, shape index: {}]
  %s4 = inlined_call_operand.vmem [shape: f32[1,64], index: 4, kind: input, shape index: {}]
  %s5 = inlined_call_operand.vmem [shape: f32[32,64], index: 5, kind: input, shape index: {}]
  %s6 = inlined_call_operand.vmem [shape: f32[1,64], index: 6, kind: input, shape index: {}]
  %s7 = inlined_call_operand.vmem [shape: f32[15,64], index: 7, kind: input, shape index: {}]
  %s8 = inlined_call_operand.vmem [shape: f32[1,64], index: 8, kind: input, shape index: {}]
  %s9 = inlined_call_operand.vmem [shape: f32[1,64], index: 9, kind: input, shape index: {}]
  %s10 = inlined_call_operand.vmem [shape: f32[64,32], index: 10, kind: input, shape index: {}]
  %s11 = inlined_call_operand.vmem [shape: f32[1,32], index: 11, kind: input, shape index: {}]
  %s12 = inlined_call_operand.hbm [shape: f32[2,24,32], index: 12, kind: output, shape index: {}]
  %s13 = sld [smem:[#allocation0]]
  $region81: #{tpu_custom_call.1} parent=0
    _
  %s15 = ssub.s32 1, %s13
  %s16 = scalar_select 0, %s15, %s13
  $region1: #{tpu_custom_call.1} parent=0
    #allocation2 [shape = 'u8[8192]{0}', space=vmem, size = 0x2000, scoped, tag = 'output window, operand 0']
    #allocation3 [shape = 's32[2]{0}', space=sflag, size = 0x8, scoped, tag = 'scoped memory for tpu_custom_call.1']
    %17 = vsyncpa [#allocation3], 0
    %s18 = scalar_lea.sflag [#allocation3], 1
    %19 = vsyncpa %s18, 0
    loop: start=0, step=1, limit=8
    $region2: #{tpu_custom_call.1} parent=1 // loop_pre_header
      _
    $region3: #{tpu_custom_call.1} parent=1 // loop_header
      %s21 = sphi 0, %s25
      %p22 = scmp.ge.s32.totalorder %s21, 8
      %s28 = sphi 0, %s40
      %s29 = sphi 0, %s36
      %s30 = sphi 0, %s28
      %s31 = sphi 0, %s29
      %s32 = sphi 0, %s30
      %s33 = sphi 0, %s31
      %s45 = sphi 0, %s47
      %s48 = sphi 0, %s45
      %s49 = sphi 0, %s48
      %s65 = sphi 0, %s49
      %s69 = sphi 0, %s69
      %s71 = sphi 0, %s69
      %s72 = sphi 0, %s71
      %s86 = sphi 0, %s72
      %s90 = sphi 0, %s90
      %s92 = sphi 0, %s90
      %s93 = sphi 0, %s92
      %s107 = sphi 0, %s93
      %s111 = sphi 0, %s111
      %s113 = sphi 0, %s111
      %s114 = sphi 0, %s113
      %s128 = sphi 0, %s114
      %s132 = sphi 0, %s132
      %s134 = sphi 0, %s132
      %s135 = sphi 0, %s134
      %s149 = sphi 0, %s135
      %s153 = sphi 0, %s153
      %s155 = sphi 0, %s153
      %s156 = sphi 0, %s155
      %s170 = sphi 0, %s156
      %s174 = sphi 0, %s174
      %s176 = sphi 0, %s174
      %s177 = sphi 0, %s176
      %s191 = sphi 0, %s177
      %s195 = sphi 0, %s195
      %s197 = sphi 0, %s195
      %s198 = sphi 0, %s197
      %s212 = sphi 0, %s198
      %s216 = sphi 0, %s216
      %s218 = sphi 0, %s216
      %s219 = sphi 0, %s218
      %s233 = sphi 0, %s219
      %s237 = sphi 0, %s237
      %s239 = sphi 0, %s237
      %s240 = sphi 0, %s239
      %s254 = sphi 0, %s240
      %s258 = sphi 0, %s258
      %s260 = sphi 0, %s258
      %s261 = sphi 0, %s260
      %s275 = sphi 0, %s261
      %s279 = sphi 0, %s279
      %s281 = sphi 0, %s279
      %s282 = sphi 0, %s281
      %s296 = sphi 0, %s282
      %s304 = sphi 0, %s306
      %s307 = sphi 0, %s304
      %s308 = sphi 0, %s307
      %s324 = sphi 0, %s308
    $region4: #{tpu_custom_call.1} parent=1 // loop_header_branch
      %24 = sbr.rel (%p22) target = $region8
    $region5: #{tpu_custom_call.1} parent=1 // loop_body
      %s26 = ssub.s32 %s21, 1
      %s27 = ssub.s32 %s21, 2
      %s34 = sadd.s32 1, %s29
      %p35 = scmp.ge.s32.totalorder %s34, 3
      %s36 = scalar_select %p35, 0, %s34
      %s37 = sadd.s32 1, %s28
      %s38 = scalar_select %p35, %s37, %s28
      %p39 = scmp.ge.s32.totalorder %s38, 2
      %s40 = scalar_select %p39, 0, %s38
      %s41 = ssub.s32 %s28, %s40
      %s42 = ssub.s32 %s29, %s36
      %s43 = sor.u32 %s41, %s42
      %p44 = scmp.eq.s32.totalorder %s43, 0
      %s46 = sadd.s32 %s45, 1
      %s47 = scalar_select %p44, %s45, %s46
      %p50 = pneg %p44
      %p51 = scmp.eq.s32.totalorder %s21, 5
      %p52 = por %p50, %p51
      %p53 = scmp.ne.s32.totalorder %s45, %s48
      %p54 = scmp.eq.s32.totalorder %s21, 0
      %p55 = por %p53, %p54
      %p56 = scmp.ne.s32.totalorder %s45, %s48
      %p57 = scmp.eq.s32.totalorder %s26, 5
      %p58 = por %p56, %p57
      %p59 = scmp.ne.s32.totalorder %s48, %s49
      %p60 = scmp.eq.s32.totalorder %s26, 0
      %p61 = por %p59, %p60
      %p62 = scmp.ne.s32.totalorder %s48, %s49
      %p63 = scmp.eq.s32.totalorder %s27, 5
      %p64 = por %p62, %p63
      %p66 = scmp.ne.s32.totalorder %s49, %s65
      %p67 = scmp.eq.s32.totalorder %s27, 0
      %p68 = por %p66, %p67
      %s70 = sadd.s32 %s69, 1
      %p73 = scmp.eq.s32.totalorder %s21, 5
      %p74 = scmp.ne.s32.totalorder %s69, %s71
      %p75 = scmp.eq.s32.totalorder %s21, 0
      %p76 = por %p74, %p75
      %p77 = scmp.ne.s32.totalorder %s69, %s71
      %p78 = scmp.eq.s32.totalorder %s26, 5
      %p79 = por %p77, %p78
      %p80 = scmp.ne.s32.totalorder %s71, %s72
      %p81 = scmp.eq.s32.totalorder %s26, 0
      %p82 = por %p80, %p81
      %p83 = scmp.ne.s32.totalorder %s71, %s72
      %p84 = scmp.eq.s32.totalorder %s27, 5
      %p85 = por %p83, %p84
      %p87 = scmp.ne.s32.totalorder %s72, %s86
      %p88 = scmp.eq.s32.totalorder %s27, 0
      %p89 = por %p87, %p88
      %s91 = sadd.s32 %s90, 1
      %p94 = scmp.eq.s32.totalorder %s21, 5
      %p95 = scmp.ne.s32.totalorder %s90, %s92
      %p96 = scmp.eq.s32.totalorder %s21, 0
      %p97 = por %p95, %p96
      %p98 = scmp.ne.s32.totalorder %s90, %s92
      %p99 = scmp.eq.s32.totalorder %s26, 5
      %p100 = por %p98, %p99
      %p101 = scmp.ne.s32.totalorder %s92, %s93
      %p102 = scmp.eq.s32.totalorder %s26, 0
      %p103 = por %p101, %p102
      %p104 = scmp.ne.s32.totalorder %s92, %s93
      %p105 = scmp.eq.s32.totalorder %s27, 5
      %p106 = por %p104, %p105
      %p108 = scmp.ne.s32.totalorder %s93, %s107
      %p109 = scmp.eq.s32.totalorder %s27, 0
      %p110 = por %p108, %p109
      %s112 = sadd.s32 %s111, 1
      %p115 = scmp.eq.s32.totalorder %s21, 5
      %p116 = scmp.ne.s32.totalorder %s111, %s113
      %p117 = scmp.eq.s32.totalorder %s21, 0
      %p118 = por %p116, %p117
      %p119 = scmp.ne.s32.totalorder %s111, %s113
      %p120 = scmp.eq.s32.totalorder %s26, 5
      %p121 = por %p119, %p120
      %p122 = scmp.ne.s32.totalorder %s113, %s114
      %p123 = scmp.eq.s32.totalorder %s26, 0
      %p124 = por %p122, %p123
      %p125 = scmp.ne.s32.totalorder %s113, %s114
      %p126 = scmp.eq.s32.totalorder %s27, 5
      %p127 = por %p125, %p126
      %p129 = scmp.ne.s32.totalorder %s114, %s128
      %p130 = scmp.eq.s32.totalorder %s27, 0
      %p131 = por %p129, %p130
      %s133 = sadd.s32 %s132, 1
      %p136 = scmp.eq.s32.totalorder %s21, 5
      %p137 = scmp.ne.s32.totalorder %s132, %s134
      %p138 = scmp.eq.s32.totalorder %s21, 0
      %p139 = por %p137, %p138
      %p140 = scmp.ne.s32.totalorder %s132, %s134
      %p141 = scmp.eq.s32.totalorder %s26, 5
      %p142 = por %p140, %p141
      %p143 = scmp.ne.s32.totalorder %s134, %s135
      %p144 = scmp.eq.s32.totalorder %s26, 0
      %p145 = por %p143, %p144
      %p146 = scmp.ne.s32.totalorder %s134, %s135
      %p147 = scmp.eq.s32.totalorder %s27, 5
      %p148 = por %p146, %p147
      %p150 = scmp.ne.s32.totalorder %s135, %s149
      %p151 = scmp.eq.s32.totalorder %s27, 0
      %p152 = por %p150, %p151
      %s154 = sadd.s32 %s153, 1
      %p157 = scmp.eq.s32.totalorder %s21, 5
      %p158 = scmp.ne.s32.totalorder %s153, %s155
      %p159 = scmp.eq.s32.totalorder %s21, 0
      %p160 = por %p158, %p159
      %p161 = scmp.ne.s32.totalorder %s153, %s155
      %p162 = scmp.eq.s32.totalorder %s26, 5
      %p163 = por %p161, %p162
      %p164 = scmp.ne.s32.totalorder %s155, %s156
      %p165 = scmp.eq.s32.totalorder %s26, 0
      %p166 = por %p164, %p165
      %p167 = scmp.ne.s32.totalorder %s155, %s156
      %p168 = scmp.eq.s32.totalorder %s27, 5
      %p169 = por %p167, %p168
      %p171 = scmp.ne.s32.totalorder %s156, %s170
      %p172 = scmp.eq.s32.totalorder %s27, 0
      %p173 = por %p171, %p172
      %s175 = sadd.s32 %s174, 1
      %p178 = scmp.eq.s32.totalorder %s21, 5
      %p179 = scmp.ne.s32.totalorder %s174, %s176
      %p180 = scmp.eq.s32.totalorder %s21, 0
      %p181 = por %p179, %p180
      %p182 = scmp.ne.s32.totalorder %s174, %s176
      %p183 = scmp.eq.s32.totalorder %s26, 5
      %p184 = por %p182, %p183
      %p185 = scmp.ne.s32.totalorder %s176, %s177
      %p186 = scmp.eq.s32.totalorder %s26, 0
      %p187 = por %p185, %p186
      %p188 = scmp.ne.s32.totalorder %s176, %s177
      %p189 = scmp.eq.s32.totalorder %s27, 5
      %p190 = por %p188, %p189
      %p192 = scmp.ne.s32.totalorder %s177, %s191
      %p193 = scmp.eq.s32.totalorder %s27, 0
      %p194 = por %p192, %p193
      %s196 = sadd.s32 %s195, 1
      %p199 = scmp.eq.s32.totalorder %s21, 5
      %p200 = scmp.ne.s32.totalorder %s195, %s197
      %p201 = scmp.eq.s32.totalorder %s21, 0
      %p202 = por %p200, %p201
      %p203 = scmp.ne.s32.totalorder %s195, %s197
      %p204 = scmp.eq.s32.totalorder %s26, 5
      %p205 = por %p203, %p204
      %p206 = scmp.ne.s32.totalorder %s197, %s198
      %p207 = scmp.eq.s32.totalorder %s26, 0
      %p208 = por %p206, %p207
      %p209 = scmp.ne.s32.totalorder %s197, %s198
      %p210 = scmp.eq.s32.totalorder %s27, 5
      %p211 = por %p209, %p210
      %p213 = scmp.ne.s32.totalorder %s198, %s212
      %p214 = scmp.eq.s32.totalorder %s27, 0
      %p215 = por %p213, %p214
      %s217 = sadd.s32 %s216, 1
      %p220 = scmp.eq.s32.totalorder %s21, 5
      %p221 = scmp.ne.s32.totalorder %s216, %s218
      %p222 = scmp.eq.s32.totalorder %s21, 0
      %p223 = por %p221, %p222
      %p224 = scmp.ne.s32.totalorder %s216, %s218
      %p225 = scmp.eq.s32.totalorder %s26, 5
      %p226 = por %p224, %p225
      %p227 = scmp.ne.s32.totalorder %s218, %s219
      %p228 = scmp.eq.s32.totalorder %s26, 0
      %p229 = por %p227, %p228
      %p230 = scmp.ne.s32.totalorder %s218, %s219
      %p231 = scmp.eq.s32.totalorder %s27, 5
      %p232 = por %p230, %p231
      %p234 = scmp.ne.s32.totalorder %s219, %s233
      %p235 = scmp.eq.s32.totalorder %s27, 0
      %p236 = por %p234, %p235
      %s238 = sadd.s32 %s237, 1
      %p241 = scmp.eq.s32.totalorder %s21, 5
      %p242 = scmp.ne.s32.totalorder %s237, %s239
      %p243 = scmp.eq.s32.totalorder %s21, 0
      %p244 = por %p242, %p243
      %p245 = scmp.ne.s32.totalorder %s237, %s239
      %p246 = scmp.eq.s32.totalorder %s26, 5
      %p247 = por %p245, %p246
      %p248 = scmp.ne.s32.totalorder %s239, %s240
      %p249 = scmp.eq.s32.totalorder %s26, 0
      %p250 = por %p248, %p249
      %p251 = scmp.ne.s32.totalorder %s239, %s240
      %p252 = scmp.eq.s32.totalorder %s27, 5
      %p253 = por %p251, %p252
      %p255 = scmp.ne.s32.totalorder %s240, %s254
      %p256 = scmp.eq.s32.totalorder %s27, 0
      %p257 = por %p255, %p256
      %s259 = sadd.s32 %s258, 1
      %p262 = scmp.eq.s32.totalorder %s21, 5
      %p263 = scmp.ne.s32.totalorder %s258, %s260
      %p264 = scmp.eq.s32.totalorder %s21, 0
      %p265 = por %p263, %p264
      %p266 = scmp.ne.s32.totalorder %s258, %s260
      %p267 = scmp.eq.s32.totalorder %s26, 5
      %p268 = por %p266, %p267
      %p269 = scmp.ne.s32.totalorder %s260, %s261
      %p270 = scmp.eq.s32.totalorder %s26, 0
      %p271 = por %p269, %p270
      %p272 = scmp.ne.s32.totalorder %s260, %s261
      %p273 = scmp.eq.s32.totalorder %s27, 5
      %p274 = por %p272, %p273
      %p276 = scmp.ne.s32.totalorder %s261, %s275
      %p277 = scmp.eq.s32.totalorder %s27, 0
      %p278 = por %p276, %p277
      %s280 = sadd.s32 %s279, 1
      %p283 = scmp.eq.s32.totalorder %s21, 5
      %p284 = scmp.ne.s32.totalorder %s279, %s281
      %p285 = scmp.eq.s32.totalorder %s21, 0
      %p286 = por %p284, %p285
      %p287 = scmp.ne.s32.totalorder %s279, %s281
      %p288 = scmp.eq.s32.totalorder %s26, 5
      %p289 = por %p287, %p288
      %p290 = scmp.ne.s32.totalorder %s281, %s282
      %p291 = scmp.eq.s32.totalorder %s26, 0
      %p292 = por %p290, %p291
      %p293 = scmp.ne.s32.totalorder %s281, %s282
      %p294 = scmp.eq.s32.totalorder %s27, 5
      %p295 = por %p293, %p294
      %p297 = scmp.ne.s32.totalorder %s282, %s296
      %p298 = scmp.eq.s32.totalorder %s27, 0
      %p299 = por %p297, %p298
      %s300 = ssub.s32 %s28, %s40
      %s301 = ssub.s32 %s29, %s36
      %s302 = sor.u32 %s300, %s301
      %p303 = scmp.eq.s32.totalorder %s302, 0
      %s305 = sadd.s32 %s304, 1
      %s306 = scalar_select %p303, %s304, %s305
      %p309 = pneg %p303
      %p310 = scmp.eq.s32.totalorder %s21, 5
      %p311 = por %p309, %p310
      %p312 = scmp.ne.s32.totalorder %s304, %s307
      %p313 = scmp.eq.s32.totalorder %s21, 0
      %p314 = por %p312, %p313
      %p315 = scmp.ne.s32.totalorder %s304, %s307
      %p316 = scmp.eq.s32.totalorder %s26, 5
      %p317 = por %p315, %p316
      %p318 = scmp.ne.s32.totalorder %s307, %s308
      %p319 = scmp.eq.s32.totalorder %s26, 0
      %p320 = por %p318, %p319
      %p321 = scmp.ne.s32.totalorder %s307, %s308
      %p322 = scmp.eq.s32.totalorder %s27, 5
      %p323 = por %p321, %p322
      %p325 = scmp.ne.s32.totalorder %s308, %s324
      %p326 = scmp.eq.s32.totalorder %s27, 0
      %p327 = por %p325, %p326
      %p328 = scmp.le.s32.totalorder 1, %s21
      %p329 = scmp.lt.s32.totalorder %s21, 7
      %p330 = pnand %p328, %p329
      %p331 = pneg %p330
      // Predicated region
      $region9: #{tpu_custom_call.1} parent=5 // pred_check
        _
      $region10: #{tpu_custom_call.1} parent=5 // pred_check_branch
        %333 = sbr.rel (%p330) target = $region12
      $region11: #{tpu_custom_call.1} parent=5 // pred_region
        %s334 = ssub.s32 %s21, 1
        // Predicated region
        $region13: #{tpu_custom_call.1} parent=11 // pred_check
          %p335 = pneg %p82
        $region14: #{tpu_custom_call.1} parent=11 // pred_check_branch
          %337 = sbr.rel (%p335) target = $region16
        $region15: #{tpu_custom_call.1} parent=11 // pred_region
          _
        $region16: #{tpu_custom_call.1} parent=11 // pred_fallthru
          _
        // Predicated region
        $region17: #{tpu_custom_call.1} parent=11 // pred_check
          %p338 = pneg %p103
        $region18: #{tpu_custom_call.1} parent=11 // pred_check_branch
          %340 = sbr.rel (%p338) target = $region20
        $region19: #{tpu_custom_call.1} parent=11 // pred_region
          _
        $region20: #{tpu_custom_call.1} parent=11 // pred_fallthru
          _
        // Predicated region
        $region21: #{tpu_custom_call.1} parent=11 // pred_check
          %p341 = pneg %p124
        $region22: #{tpu_custom_call.1} parent=11 // pred_check_branch
          %343 = sbr.rel (%p341) target = $region24
        $region23: #{tpu_custom_call.1} parent=11 // pred_region
          _
        $region24: #{tpu_custom_call.1} parent=11 // pred_fallthru
          _
        // Predicated region
        $region25: #{tpu_custom_call.1} parent=11 // pred_check
          %p344 = pneg %p145
        $region26: #{tpu_custom_call.1} parent=11 // pred_check_branch
          %346 = sbr.rel (%p344) target = $region28
        $region27: #{tpu_custom_call.1} parent=11 // pred_region
          _
        $region28: #{tpu_custom_call.1} parent=11 // pred_fallthru
          _
        // Predicated region
        $region29: #{tpu_custom_call.1} parent=11 // pred_check
          %p347 = pneg %p166
        $region30: #{tpu_custom_call.1} parent=11 // pred_check_branch
          %349 = sbr.rel (%p347) target = $region32
        $region31: #{tpu_custom_call.1} parent=11 // pred_region
          _
        $region32: #{tpu_custom_call.1} parent=11 // pred_fallthru
          _
        // Predicated region
        $region33: #{tpu_custom_call.1} parent=11 // pred_check
          %p350 = pneg %p187
        $region34: #{tpu_custom_call.1} parent=11 // pred_check_branch
          %352 = sbr.rel (%p350) target = $region36
        $region35: #{tpu_custom_call.1} parent=11 // pred_region
          _
        $region36: #{tpu_custom_call.1} parent=11 // pred_fallthru
          _
        // Predicated region
        $region37: #{tpu_custom_call.1} parent=11 // pred_check
          %p353 = pneg %p208
        $region38: #{tpu_custom_call.1} parent=11 // pred_check_branch
          %355 = sbr.rel (%p353) target = $region40
        $region39: #{tpu_custom_call.1} parent=11 // pred_region
          _
        $region40: #{tpu_custom_call.1} parent=11 // pred_fallthru
          _
        // Predicated region
        $region41: #{tpu_custom_call.1} parent=11 // pred_check
          %p356 = pneg %p229
        $region42: #{tpu_custom_call.1} parent=11 // pred_check_branch
          %358 = sbr.rel (%p356) target = $region44
        $region43: #{tpu_custom_call.1} parent=11 // pred_region
          _
        $region44: #{tpu_custom_call.1} parent=11 // pred_fallthru
          _
        // Predicated region
        $region45: #{tpu_custom_call.1} parent=11 // pred_check
          %p359 = pneg %p250
        $region46: #{tpu_custom_call.1} parent=11 // pred_check_branch
          %361 = sbr.rel (%p359) target = $region48
        $region47: #{tpu_custom_call.1} parent=11 // pred_region
          _
        $region48: #{tpu_custom_call.1} parent=11 // pred_fallthru
          _
        // Predicated region
        $region49: #{tpu_custom_call.1} parent=11 // pred_check
          %p362 = pneg %p271
        $region50: #{tpu_custom_call.1} parent=11 // pred_check_branch
          %364 = sbr.rel (%p362) target = $region52
        $region51: #{tpu_custom_call.1} parent=11 // pred_region
          _
        $region52: #{tpu_custom_call.1} parent=11 // pred_fallthru
          _
        // Predicated region
        $region53: #{tpu_custom_call.1} parent=11 // pred_check
          %p365 = pneg %p292
        $region54: #{tpu_custom_call.1} parent=11 // pred_check_branch
          %367 = sbr.rel (%p365) target = $region56
        $region55: #{tpu_custom_call.1} parent=11 // pred_region
          _
        $region56: #{tpu_custom_call.1} parent=11 // pred_fallthru
          _
      $region12: #{tpu_custom_call.1} parent=5 // pred_fallthru
        _
      %p368 = scmp.lt.s32.totalorder %s21, 6
      // Predicated region
      $region57: #{tpu_custom_call.1} parent=5 // pred_check
        %p369 = pneg %p368
      $region58: #{tpu_custom_call.1} parent=5 // pred_check_branch
        %371 = sbr.rel (%p369) target = $region60
      $region59: #{tpu_custom_call.1} parent=5 // pred_region
        // Predicated region
        $region61: #{tpu_custom_call.1} parent=59 // pred_check
          %p372 = pneg %p55
        $region62: #{tpu_custom_call.1} parent=59 // pred_check_branch
          %374 = sbr.rel (%p372) target = $region64
        $region63: #{tpu_custom_call.1} parent=59 // pred_region
          %p375 = scmp.lt.s32.totalorder %s28, 1
          %s376 = scalar_select %p375, %s28, 1
          %p377 = scmp.lt.s32.totalorder %s29, 2
          %s378 = scalar_select %p377, %s29, 2
          %s379 = smul.addr %s378, 3
          %s380 = smul.addr %s376, 9
          %s381 = sadd.s32 %s379, %s380
          %s382 = smul.addr %s381, 8
          %s383 = scalar_lea.vmem %s0, %s382
        $region64: #{tpu_custom_call.1} parent=59 // pred_fallthru
          _
      $region60: #{tpu_custom_call.1} parent=5 // pred_fallthru
        _
      %p384 = scmp.le.s32.totalorder 1, %s21
      %p385 = scmp.lt.s32.totalorder %s21, 7
      %p386 = pnand %p384, %p385
      %p387 = pneg %p386
      // Predicated region
      $region65: #{tpu_custom_call.1} parent=5 // pred_check
        _
      $region66: #{tpu_custom_call.1} parent=5 // pred_check_branch
        %389 = sbr.rel (%p386) target = $region68
      $region67: #{tpu_custom_call.1} parent=5 // pred_region
        %s390 = ssub.s32 %s21, 1
        %p391 = scmp.lt.s32.totalorder %s30, 1
        %s392 = scalar_select %p391, %s30, 1
        %p393 = scmp.lt.s32.totalorder %s31, 2
        %s394 = scalar_select %p393, %s31, 2
        %s395 = smul.addr %s394, 3
        %s396 = smul.addr %s392, 9
        %s397 = sadd.s32 %s395, %s396
        %s398 = smul.addr %s397, 8
        %s399 = scalar_lea.vmem %s0, %s398
        %p400 = pneg %p61
        %p401 = pneg %p58
        %p402 = pneg %p82
        %p403 = pneg %p79
        %p404 = pneg %p103
        %p405 = pneg %p100
        %p406 = pneg %p124
        %p407 = pneg %p121
        %p408 = pneg %p145
        %p409 = pneg %p142
        %p410 = pneg %p166
        %p411 = pneg %p163
        %p412 = pneg %p187
        %p413 = pneg %p184
        %p414 = pneg %p208
        %p415 = pneg %p205
        %p416 = pneg %p229
        %p417 = pneg %p226
        %p418 = pneg %p250
        %p419 = pneg %p247
        %p420 = pneg %p271
        %p421 = pneg %p268
        %p422 = pneg %p292
        %p423 = pneg %p289
        %p424 = pneg %p320
        %p425 = pneg %p317
        %s426 = sand.u32 %s307, 1
        %s427 = scalar_lea.sflag [#allocation3], %s426
        %s428 = sand.u32 %s307, 1
        %s429 = smul.addr %s428, 8
        %s430 = scalar_lea.vmem [#allocation2], %s429
        %p431 = scmp.lt.s32.totalorder %s30, 1
        %s432 = scalar_select %p431, %s30, 1
        %p433 = scmp.lt.s32.totalorder %s31, 2
        %s434 = scalar_select %p433, %s31, 2
        %s435 = smul.addr %s434, 3
        %s436 = smul.addr %s432, 9
        %s437 = sadd.s32 %s435, %s436
        %s438 = smul.addr %s437, 8
        %s439 = scalar_lea.vmem %s0, %s438
        %v440 = vld [vmem:[%s439] sm:$0xff]
        %v441 = vld [vmem:[%s439 + $0x8] sm:$0xff]
        %v442 = vld [vmem:[%s439 + $0x10] sm:$0x3f]
        %vm443 = vcmask 261120
        %v444 = vsel %vm443, %v440, 0.0
        %445 = vadd.xlane.f32.xlu0 %v444
        %v446 = vpop.xlane.xlu0 %445
        %v447 = vsel %vm443, %v441, 0.0
        %448 = vadd.xlane.f32.xlu0 %v447
        %v449 = vpop.xlane.xlu0 %448
        %vm450 = vcmask 259072
        %v451 = vsel %vm450, %v442, 0.0
        %452 = vadd.xlane.f32.xlu0 %v451
        %v453 = vpop.xlane.xlu0 %452
        %v454 = vrcp.pop 32.0
        %v455 = vmul.f32 32.0, %v454
        %v456 = vsub.f32 1.0, %v455
        %v457 = vmul.f32 %v454, %v456
        %v458 = vadd.f32 %v454, %v457
        %vm459 = vweird.f32 %v454
        %v460 = vsel %vm459, %v454, %v458
        %v461 = vmul.f32 %v446, %v460
        %v462 = vmul.f32 %v449, %v460
        %v463 = vmul.f32 %v453, %v460
        %v464 = vsub.f32 %v440, %v461
        %v465 = vsub.f32 %v441, %v462
        %v466 = vsub.f32 %v442, %v463
        %v467 = vmul.f32 %v464, %v464
        %v468 = vmul.f32 %v465, %v465
        %v469 = vmul.f32 %v466, %v466
        %v470 = vsel %vm443, %v467, 0.0
        %471 = vadd.xlane.f32.xlu0 %v470
        %v472 = vpop.xlane.xlu0 %471
        %v473 = vsel %vm443, %v468, 0.0
        %474 = vadd.xlane.f32.xlu0 %v473
        %v475 = vpop.xlane.xlu0 %474
        %v476 = vsel %vm450, %v469, 0.0
        %477 = vadd.xlane.f32.xlu0 %v476
        %v478 = vpop.xlane.xlu0 %477
        %v479 = vmul.f32 %v472, %v460
        %v480 = vmul.f32 %v475, %v460
        %v481 = vmul.f32 %v478, %v460
        %v482 = vadd.f32 %v479, 1e-05
        %v483 = vadd.f32 %v480, 1e-05
        %v484 = vadd.f32 %v481, 1e-05
        %v485 = vrsqrt.pop %v482
        %v486 = vmul.f32 %v485, %v482
        %v487 = vmul.f32 %v486, %v485
        %v488 = vmul.f32 0.5, %v487
        %v489 = vsub.f32 1.5, %v488
        %v490 = vmul.f32 %v485, %v489
        %vm491 = vweird.f32 %v482
        %vm492 = vweird.f32 %v485
        %vm493 = vmor %vm491, %vm492
        %v494 = vsel %vm493, %v485, %v490
        %v495 = vrsqrt.pop %v483
        %v496 = vmul.f32 %v495, %v483
        %v497 = vmul.f32 %v496, %v495
        %v498 = vmul.f32 0.5, %v497
        %v499 = vsub.f32 1.5, %v498
        %v500 = vmul.f32 %v495, %v499
        %vm501 = vweird.f32 %v483
        %vm502 = vweird.f32 %v495
        %vm503 = vmor %vm501, %vm502
        %v504 = vsel %vm503, %v495, %v500
        %v505 = vrsqrt.pop %v484
        %v506 = vmul.f32 %v505, %v484
        %v507 = vmul.f32 %v506, %v505
        %v508 = vmul.f32 0.5, %v507
        %v509 = vsub.f32 1.5, %v508
        %v510 = vmul.f32 %v505, %v509
        %vm511 = vweird.f32 %v484
        %vm512 = vweird.f32 %v505
        %vm513 = vmor %vm511, %vm512
        %v514 = vsel %vm513, %v505, %v510
        %v515 = vmul.f32 %v464, %v494
        %v516 = vmul.f32 %v465, %v504
        %v517 = vmul.f32 %v466, %v514
        %v518 = vld [vmem:[%s1] sm:$0x1]
        %v520 = vperm.slane %v518, 0
        %v522 = vmul.f32 %v515, %v520
        %v523 = vmul.f32 %v516, %v520
        %v524 = vmul.f32 %v517, %v520
        %v525 = vld [vmem:[%s2] sm:$0x1]
        %v527 = vperm.slane %v525, 0
        %v529 = vadd.f32 %v522, %v527
        %v530 = vadd.f32 %v523, %v527
        %v531 = vadd.f32 %v524, %v527
        %v532 = vld [vmem:[%s3] sm:$0xff]
        %v533 = vld [vmem:[%s3 + $0x8] sm:$0xff]
        %v534 = vld [vmem:[%s3 + $0x10] sm:$0xff]
        %v535 = vld [vmem:[%s3 + $0x18] sm:$0xff]
        %v536 = vld [vmem:[%s4] sm:$0x1]
        %v538 = vperm.slane %v536, 0
        %v541 = vsel %vm443, %v529, 0
        %v544 = vsel %vm443, %v530, 0
        %v547 = vsel %vm443, %v531, 0
        %549 = vmatpush.msra.mxu0 0.0
        %550 = vmatpush.msra.mxu0 0.0
        %551 = vmatpush.msra.mxu0 0.0
        %552 = vmatpush.msra.mxu0 0.0
        %553 = vmatpush.msra.mxu0 0.0
        %554 = vmatpush.msra.mxu0 0.0
        %555 = vmatpush.msra.mxu0 0.0
        %556 = vmatpush.msra.mxu0 0.0
        %557 = vmatpush.msra.mxu0 0.0
        %558 = vmatpush.msra.mxu0 0.0
        %559 = vmatpush.msra.mxu0 0.0
        %560 = vmatpush.msra.mxu0 0.0
        %561 = vmatpush.msra.mxu0 %v535
        %562 = vmatpush.msra.mxu0 %v534
        %563 = vmatpush.msra.mxu0 %v533
        %564 = vmatpush.msra.mxu0 %v532
        %565 = vmatmul.f32.gmra.mxu0 %v541
        %v566 = vpop.f32.mrf.mxu0
        %v567 = vadd.f32 %v538, %v566
        %568 = vmatmul.f32.gmra.mxu0 %v544
        %v569 = vpop.f32.mrf.mxu0
        %v570 = vadd.f32 %v538, %v569
        %571 = vmatmul.f32.gmra.mxu0 %v547
        %v572 = vpop.f32.mrf.mxu0
        %v573 = vadd.f32 %v538, %v572
        %574 = vdwg.mxu0
        %v575 = vld [vmem:[%s5] sm:$0xff]
        %v576 = vld [vmem:[%s5 + $0x8] sm:$0xff]
        %v577 = vld [vmem:[%s5 + $0x10] sm:$0xff]
        %v578 = vld [vmem:[%s5 + $0x18] sm:$0xff]
        %v579 = vld [vmem:[%s6] sm:$0x1]
        %v581 = vperm.slane %v579, 0
        %583 = vmatpush.msra.mxu0 0.0
        %584 = vmatpush.msra.mxu0 0.0
        %585 = vmatpush.msra.mxu0 0.0
        %586 = vmatpush.msra.mxu0 0.0
        %587 = vmatpush.msra.mxu0 0.0
        %588 = vmatpush.msra.mxu0 0.0
        %589 = vmatpush.msra.mxu0 0.0
        %590 = vmatpush.msra.mxu0 0.0
        %591 = vmatpush.msra.mxu0 0.0
        %592 = vmatpush.msra.mxu0 0.0
        %593 = vmatpush.msra.mxu0 0.0
        %594 = vmatpush.msra.mxu0 0.0
        %595 = vmatpush.msra.mxu0 %v578
        %596 = vmatpush.msra.mxu0 %v577
        %597 = vmatpush.msra.mxu0 %v576
        %598 = vmatpush.msra.mxu0 %v575
        %599 = vmatmul.f32.gmra.mxu0 %v541
        %v600 = vpop.f32.mrf.mxu0
        %v601 = vadd.f32 %v581, %v600
        %602 = vmatmul.f32.gmra.mxu0 %v544
        %v603 = vpop.f32.mrf.mxu0
        %v604 = vadd.f32 %v581, %v603
        %605 = vmatmul.f32.gmra.mxu0 %v547
        %v606 = vpop.f32.mrf.mxu0
        %v607 = vadd.f32 %v581, %v606
        %608 = vdwg.mxu0
        %v609 = vxor.u32 %v601, 2147483648
        %v610 = vxor.u32 %v604, 2147483648
        %v611 = vxor.u32 %v607, 2147483648
        %v612 = vmul.f32 %v609, 1.442695
        %v613 = vpow.pop %v612
        %v614 = vmul.f32 %v610, 1.442695
        %v615 = vpow.pop %v614
        %v616 = vmul.f32 %v611, 1.442695
        %v617 = vpow.pop %v616
        %v618 = vadd.f32 %v613, 1.0
        %v619 = vadd.f32 %v615, 1.0
        %v620 = vadd.f32 %v617, 1.0
        %v621 = vrcp.pop %v618
        %v622 = vmul.f32 %v618, %v621
        %v623 = vsub.f32 1.0, %v622
        %v624 = vmul.f32 %v621, %v623
        %v625 = vadd.f32 %v621, %v624
        %vm626 = vweird.f32 %v618
        %vm627 = vweird.f32 %v621
        %vm628 = vmor %vm626, %vm627
        %v629 = vsel %vm628, %v621, %v625
        %v630 = vand.u32 2147483647, %v618
        %vm631 = vcmp.eq.f32.partialorder %v630, 8.507059e+37
        %v632 = vand.u32 %v618, 2147483648
        %v633 = vor.u32 1.1754944e-38, %v632
        %v634 = vsel %vm631, %v633, %v629
        %v635 = vmul.f32 1.0, %v634
        %v636 = vrcp.pop %v619
        %v637 = vmul.f32 %v619, %v636
        %v638 = vsub.f32 1.0, %v637
        %v639 = vmul.f32 %v636, %v638
        %v640 = vadd.f32 %v636, %v639
        %vm641 = vweird.f32 %v619
        %vm642 = vweird.f32 %v636
        %vm643 = vmor %vm641, %vm642
        %v644 = vsel %vm643, %v636, %v640
        %v645 = vand.u32 2147483647, %v619
        %vm646 = vcmp.eq.f32.partialorder %v645, 8.507059e+37
        %v647 = vand.u32 %v619, 2147483648
        %v648 = vor.u32 1.1754944e-38, %v647
        %v649 = vsel %vm646, %v648, %v644
        %v650 = vmul.f32 1.0, %v649
        %v651 = vrcp.pop %v620
        %v652 = vmul.f32 %v620, %v651
        %v653 = vsub.f32 1.0, %v652
        %v654 = vmul.f32 %v651, %v653
        %v655 = vadd.f32 %v651, %v654
        %vm656 = vweird.f32 %v620
        %vm657 = vweird.f32 %v651
        %vm658 = vmor %vm656, %vm657
        %v659 = vsel %vm658, %v651, %v655
        %v660 = vand.u32 2147483647, %v620
        %vm661 = vcmp.eq.f32.partialorder %v660, 8.507059e+37
        %v662 = vand.u32 %v620, 2147483648
        %v663 = vor.u32 1.1754944e-38, %v662
        %v664 = vsel %vm661, %v663, %v659
        %v665 = vmul.f32 1.0, %v664
        %v666 = vmul.f32 %v567, %v635
        %v667 = vmul.f32 %v570, %v650
        %v668 = vmul.f32 %v573, %v665
        %v669 = vlaneseq
        %v670 = vshrl.u32 %v669, 7
        %v671 = vadd.s32 %v670, 8
        %v672 = vadd.s32 %v670, 16
        %s673 = smul.u32 %s31, 8
        %s674 = ssub.s32 %s673, 7
        %v675 = vstv %s674
        %v676 = vadd.s32 %v675, %v670
        %v677 = vadd.s32 %v675, %v671
        %v678 = vadd.s32 %v675, %v672
        %vm679 = vcmp.ge.s32.totalorder %v676, 0
        %vm680 = vcmp.ge.s32.totalorder %v677, 0
        %vm681 = vcmp.ge.s32.totalorder %v678, 0
        %vm682 = vcmp.lt.s32.totalorder %v676, 24
        %vm683 = vcmp.lt.s32.totalorder %v677, 24
        %vm684 = vcmp.lt.s32.totalorder %v678, 24
        %vm685 = vmand %vm679, %vm682
        %vm686 = vmand %vm680, %vm683
        %vm687 = vmand %vm681, %vm684
        %v688 = vsel %vm685, 1, 0
        %v689 = vsel %vm686, 1, 0
        %v690 = vsel %vm687, 1, 0
        %vm691 = vcmp.eq.s32.totalorder %v688, 1
        %vm692 = vcmp.eq.s32.totalorder %v689, 1
        %vm693 = vcmp.eq.s32.totalorder %v690, 1
        %v694 = vsel %vm691, %v666, 0.0
        %v695 = vsel %vm692, %v667, 0.0
        %v696 = vsel %vm693, %v668, 0.0
        %v697 = vld [vmem:[%s7] sm:$0xff]
        %v698 = vld [vmem:[%s7 + $0x8] sm:$0x7f]
        %v699 = vperm.slane %v697, 0
        %v700 = vmul.f32 %v699, %v694
        %v701 = vadd.f32 %v700, 0.0
        %v702 = vperm.slane %v697, 1
        %v703 = vmul.f32 %v702, %v694
        %v704 = vmul.f32 %v702, %v695
        %vm707 = vcmask 1046528
        %v708 = vrot.slane %v703, 1
        %v709 = vrot.slane %v704, 1
        %v710 = vsel %vm707, %v708, %v709
        %v712 = vadd.f32 %v701, %v710
        %v713 = vperm.slane %v697, 2
        %v714 = vmul.f32 %v713, %v694
        %v715 = vmul.f32 %v713, %v695
        %vm718 = vcmask 1045504
        %v719 = vrot.slane %v714, 2
        %v720 = vrot.slane %v715, 2
        %v721 = vsel %vm718, %v719, %v720
        %v723 = vadd.f32 %v712, %v721
        %v724 = vperm.slane %v697, 3
        %v725 = vmul.f32 %v724, %v694
        %v726 = vmul.f32 %v724, %v695
        %vm729 = vcmask 1044480
        %v730 = vrot.slane %v725, 3
        %v731 = vrot.slane %v726, 3
        %v732 = vsel %vm729, %v730, %v731
        %v734 = vadd.f32 %v723, %v732
        %v735 = vperm.slane %v697, 4
        %v736 = vmul.f32 %v735, %v694
        %v737 = vmul.f32 %v735, %v695
        %vm740 = vcmask 1043456
        %v741 = vrot.slane %v736, 4
        %v742 = vrot.slane %v737, 4
        %v743 = vsel %vm740, %v741, %v742
        %v745 = vadd.f32 %v734, %v743
        %v746 = vperm.slane %v697, 5
        %v747 = vmul.f32 %v746, %v694
        %v748 = vmul.f32 %v746, %v695
        %vm751 = vcmask 1042432
        %v752 = vrot.slane %v747, 5
        %v753 = vrot.slane %v748, 5
        %v754 = vsel %vm751, %v752, %v753
        %v756 = vadd.f32 %v745, %v754
        %v757 = vperm.slane %v697, 6
        %v758 = vmul.f32 %v757, %v694
        %v759 = vmul.f32 %v757, %v695
        %vm762 = vcmask 1041408
        %v763 = vrot.slane %v758, 6
        %v764 = vrot.slane %v759, 6
        %v765 = vsel %vm762, %v763, %v764
        %v767 = vadd.f32 %v756, %v765
        %v768 = vperm.slane %v697, 7
        %v769 = vmul.f32 %v768, %v694
        %v770 = vmul.f32 %v768, %v695
        %vm773 = vcmask 1040384
        %v774 = vrot.slane %v769, 7
        %v775 = vrot.slane %v770, 7
        %v776 = vsel %vm773, %v774, %v775
        %v778 = vadd.f32 %v767, %v776
        %v779 = vperm.slane %v698, 0
        %v780 = vmul.f32 %v779, %v695
        %v781 = vadd.f32 %v778, %v780
        %v782 = vperm.slane %v698, 1
        %v783 = vmul.f32 %v782, %v695
        %v784 = vmul.f32 %v782, %v696
        %v787 = vrot.slane %v783, 1
        %v788 = vrot.slane %v784, 1
        %v789 = vsel %vm707, %v787, %v788
        %v791 = vadd.f32 %v781, %v789
        %v792 = vperm.slane %v698, 2
        %v793 = vmul.f32 %v792, %v695
        %v794 = vmul.f32 %v792, %v696
        %v797 = vrot.slane %v793, 2
        %v798 = vrot.slane %v794, 2
        %v799 = vsel %vm718, %v797, %v798
        %v801 = vadd.f32 %v791, %v799
        %v802 = vperm.slane %v698, 3
        %v803 = vmul.f32 %v802, %v695
        %v804 = vmul.f32 %v802, %v696
        %v807 = vrot.slane %v803, 3
        %v808 = vrot.slane %v804, 3
        %v809 = vsel %vm729, %v807, %v808
        %v811 = vadd.f32 %v801, %v809
        %v812 = vperm.slane %v698, 4
        %v813 = vmul.f32 %v812, %v695
        %v814 = vmul.f32 %v812, %v696
        %v817 = vrot.slane %v813, 4
        %v818 = vrot.slane %v814, 4
        %v819 = vsel %vm740, %v817, %v818
        %v821 = vadd.f32 %v811, %v819
        %v822 = vperm.slane %v698, 5
        %v823 = vmul.f32 %v822, %v695
        %v824 = vmul.f32 %v822, %v696
        %v827 = vrot.slane %v823, 5
        %v828 = vrot.slane %v824, 5
        %v829 = vsel %vm751, %v827, %v828
        %v831 = vadd.f32 %v821, %v829
        %v832 = vperm.slane %v698, 6
        %v833 = vmul.f32 %v832, %v695
        %v834 = vmul.f32 %v832, %v696
        %v837 = vrot.slane %v833, 6
        %v838 = vrot.slane %v834, 6
        %v839 = vsel %vm762, %v837, %v838
        %v841 = vadd.f32 %v831, %v839
        %v842 = vld [vmem:[%s8] sm:$0x1]
        %v844 = vperm.slane %v842, 0
        %v846 = vmul.f32 %v841, %v844
        %v847 = vld [vmem:[%s9] sm:$0x1]
        %v849 = vperm.slane %v847, 0
        %v851 = vadd.f32 %v846, %v849
        %v852 = vxor.u32 %v851, 2147483648
        %v853 = vmul.f32 %v852, 1.442695
        %v854 = vpow.pop %v853
        %v855 = vadd.f32 %v854, 1.0
        %v856 = vrcp.pop %v855
        %v857 = vmul.f32 %v855, %v856
        %v858 = vsub.f32 1.0, %v857
        %v859 = vmul.f32 %v856, %v858
        %v860 = vadd.f32 %v856, %v859
        %vm861 = vweird.f32 %v855
        %vm862 = vweird.f32 %v856
        %vm863 = vmor %vm861, %vm862
        %v864 = vsel %vm863, %v856, %v860
        %v865 = vand.u32 2147483647, %v855
        %vm866 = vcmp.eq.f32.partialorder %v865, 8.507059e+37
        %v867 = vand.u32 %v855, 2147483648
        %v868 = vor.u32 1.1754944e-38, %v867
        %v869 = vsel %vm866, %v868, %v864
        %v870 = vmul.f32 1.0, %v869
        %v871 = vmul.f32 %v851, %v870
        %v872 = vld [vmem:[%s10] sm:$0xff]
        %v873 = vld [vmem:[%s10 + $0x8] sm:$0xff]
        %v874 = vld [vmem:[%s10 + $0x10] sm:$0xff]
        %v875 = vld [vmem:[%s10 + $0x18] sm:$0xff]
        %v876 = vld [vmem:[%s10 + $0x20] sm:$0xff]
        %v877 = vld [vmem:[%s10 + $0x28] sm:$0xff]
        %v878 = vld [vmem:[%s10 + $0x30] sm:$0xff]
        %v879 = vld [vmem:[%s10 + $0x38] sm:$0xff]
        %v880 = vld [vmem:[%s11] sm:$0x1]
        %v882 = vperm.slane %v880, 0
        %vm884 = vcmask 523264
        %v886 = vsel %vm884, %v871, 0
        %888 = vmatpush.msra.mxu0 0.0
        %889 = vmatpush.msra.mxu0 0.0
        %890 = vmatpush.msra.mxu0 0.0
        %891 = vmatpush.msra.mxu0 0.0
        %892 = vmatpush.msra.mxu0 0.0
        %893 = vmatpush.msra.mxu0 0.0
        %894 = vmatpush.msra.mxu0 0.0
        %895 = vmatpush.msra.mxu0 0.0
        %896 = vmatpush.msra.mxu0 %v879
        %897 = vmatpush.msra.mxu0 %v878
        %898 = vmatpush.msra.mxu0 %v877
        %899 = vmatpush.msra.mxu0 %v876
        %900 = vmatpush.msra.mxu0 %v875
        %901 = vmatpush.msra.mxu0 %v874
        %902 = vmatpush.msra.mxu0 %v873
        %903 = vmatpush.msra.mxu0 %v872
        %904 = vmatmul.f32.gmra.mxu0 %v886
        %v905 = vpop.f32.mrf.mxu0
        %v906 = vadd.f32 %v882, %v905
        %907 = vdwg.mxu0
        %908 = vst.msk [vmem:[%s430] sm:$0xff] %vm443, %v906
        %s909 = sand.u32 %s307, 1
        %s910 = scalar_lea.sflag [#allocation3], %s909
        %s911 = sand.u32 %s307, 1
        %s912 = smul.addr %s911, 8
        %s913 = scalar_lea.vmem [#allocation2], %s912
        // Predicated region
        $region69: #{tpu_custom_call.1} parent=67 // pred_check
          %p914 = pneg %p317
        $region70: #{tpu_custom_call.1} parent=67 // pred_check_branch
          %916 = sbr.rel (%p914) target = $region72
        $region71: #{tpu_custom_call.1} parent=67 // pred_region
          %918 = vsyncadd %s910, 0
          %s919 = smul.addr %s30, 3
          %s920 = sadd.s32 %s31, %s919
          %s921 = smul.addr %s920, 8
          %s922 = scalar_lea.hbm %s12, %s921
          %s924 = sshll.u32 %s913, 4
          %s925 = int_to_ptr.vmem [resolvable:$true] %s924
          %s926 = sshll.u32 %s922, 4
          %s927 = int_to_ptr.hbm [resolvable:$true] %s926
          %929 = dma.vmem_to_hbm [thread:$0]  %s925, 128, %s927, %s910
        $region72: #{tpu_custom_call.1} parent=67 // pred_fallthru
          _
      $region68: #{tpu_custom_call.1} parent=5 // pred_fallthru
        _
      %p930 = scmp.le.s32.totalorder 2, %s21
      // Predicated region
      $region73: #{tpu_custom_call.1} parent=5 // pred_check
        %p931 = pneg %p930
      $region74: #{tpu_custom_call.1} parent=5 // pred_check_branch
        %933 = sbr.rel (%p931) target = $region76
      $region75: #{tpu_custom_call.1} parent=5 // pred_region
        %s934 = ssub.s32 %s21, 2
        // Predicated region
        $region77: #{tpu_custom_call.1} parent=75 // pred_check
          %p935 = pneg %p323
        $region78: #{tpu_custom_call.1} parent=75 // pred_check_branch
          %937 = sbr.rel (%p935) target = $region80
        $region79: #{tpu_custom_call.1} parent=75 // pred_region
          %s938 = sand.u32 %s308, 1
          %s939 = scalar_lea.sflag [#allocation3], %s938
          %s940 = sand.u32 %s308, 1
          %s941 = smul.addr %s940, 8
          %s942 = scalar_lea.vmem [#allocation2], %s941
          %944 = dma.done %s939, 128
        $region80: #{tpu_custom_call.1} parent=75 // pred_fallthru
          _
      $region76: #{tpu_custom_call.1} parent=5 // pred_fallthru
        _
    $region6: #{tpu_custom_call.1} parent=1 // loop_footer
      %s25 = sadd.s32 1, %s21
    $region7: #{tpu_custom_call.1} parent=1 // loop_footer_branch
      %20 = sbr.rel target = $region3
    $region8: #{tpu_custom_call.1} parent=1 // loop_exit
      _
    %945 = vsyncpa [#allocation3], 1
    %s946 = scalar_lea.sflag [#allocation3], 1
    %947 = vsyncpa %s946, 1

</llo_original>
